<compile_context>
chip_gen: v5e
topology: v5e:2x2
jax: 0.10.0
libtpu: 0.0.40
codegen_flags: <defaults>
</compile_context>

<pallas_src>
import functools

import jax
import jax.numpy as jnp
from jax import lax
from jax.experimental import pallas as pl
from jax.experimental.pallas import tpu as pltpu

BN_EPS = 1e-5
_LANE = 128
_TL_CAP = 2048                    # max output-tile width (lanes) per grid step
_VMEM_BUDGET = 16 * 1024 * 1024   # target footprint; well under 32 MiB scoped


def _cdiv(a, b):
    return (a + b - 1) // b


def _conv_tile(xm_ref, xh_ref, wb_ref, *, K, Cin, Cout, Nb, TL, stride, dilation):
    """Conv1d for one (Nb batch rows, TL output positions) tile.

    Cin*K broadcast-FMAs on the VPU; the weight columns in wb_ref are already
    broadcast to lane width (done once in the wrapper, VMEM-resident).
    """
    xm = xm_ref[...]                                  # (Nb*Cin, TL*stride)
    xh = xh_ref[0]                                    # (Nb*Cin, H) right halo
    xw = jnp.concatenate([xm, xh], axis=-1)           # (Nb*Cin, TL*stride + H)
    xw = xw.reshape(Nb, Cin, xw.shape[-1])            # (Nb, Cin, W)
    acc = jnp.zeros((Nb, Cout, TL), jnp.float32)
    for k in range(K):
        lo = k * dilation
        if stride == 1:
            xs = xw[:, :, lo:lo + TL]                                 # (Nb,Cin,TL)
        else:
            xs = xw[:, :, lo:lo + (TL - 1) * stride + 1:stride]       # (Nb,Cin,TL)
        for ci in range(Cin):
            # wb_ref[j]: (Cout, TL) pre-broadcast weight column -> pure VPU FMA
            # plus the (Nb,1,TL) -> (Nb,Cout,TL) xs sublane broadcast.
            acc = acc + wb_ref[ci * K + k] * xs[:, ci:ci + 1, :]
    return acc


def _stats_kernel(xm_ref, xh_ref, wb_ref, stats_ref, *,
                  K, Cin, Cout, Nb, TL, stride, dilation, L_out):
    """Pass 1: conv + per-tile centered BN partials (sum, M2) per channel."""
    acc = _conv_tile(xm_ref, xh_ref, wb_ref, K=K, Cin=Cin, Cout=Cout, Nb=Nb,
                     TL=TL, stride=stride, dilation=dilation)
    lt = pl.program_id(1)
    valid = jnp.minimum(TL, L_out - lt * TL)          # valid output lanes in tile
    mask = lax.broadcasted_iota(jnp.int32, (1, 1, TL), 2) < valid
    cnt = (Nb * valid).astype(jnp.float32)

    acc_m = jnp.where(mask, acc, 0.0)
    sums = jnp.sum(jnp.sum(acc_m, axis=2, keepdims=True),
                   axis=0, keepdims=True)             # (1, Cout, 1)
    mean = sums / cnt
    d = jnp.where(mask, acc - mean, 0.0)
    m2 = jnp.sum(jnp.sum(d * d, axis=2, keepdims=True),
                 axis=0, keepdims=True)               # (1, Cout, 1)
    stats_ref[0, 0] = jnp.concatenate([sums[0], m2[0]], axis=1)   # (Cout, 2)


def _norm_kernel(xm_ref, xh_ref, wb_ref, scale_ref, shift_ref, o_ref, *,
                 K, Cin, Cout, Nb, TL, stride, dilation):
    """Pass 2: conv (recomputed) + folded BN (scale/shift) + ReLU.

    Dropout = identity (eval semantics)."""
    acc = _conv_tile(xm_ref, xh_ref, wb_ref, K=K, Cin=Cin, Cout=Cout, Nb=Nb,
                     TL=TL, stride=stride, dilation=dilation)
    o_ref[...] = jnp.maximum(acc * scale_ref[...] + shift_ref[...], 0.0)


def first_temporal_block(x, conv_weight, gamma, beta, *, stride, padding, dilation):
    """x: (N, C_in, L) f32, conv_weight: (C_out, C_in, K). Returns (N, C_out, L_out)."""
    N, Cin, L = x.shape
    Cout, Cin2, K = conv_weight.shape
    assert Cin2 == Cin
    L_out = (L + 2 * padding - dilation * (K - 1) - 1) // stride + 1
    assert L_out > 0

    # ---- batch block: smallest Nb | N with Nb*Cin a multiple of 8 (dense sublanes)
    Nb = N
    for cand in range(1, N + 1):
        if N % cand == 0 and cand * Cin >= 8 and (cand * Cin) % 8 == 0:
            Nb = cand
            break
    n_nb = N // Nb

    # ---- L tile: as large as possible (<= 2048 lanes), multiple of 128, VMEM-safe
    per_lane = 4 * _LANE * (3 * Nb * Cin * stride          # x stream (<=3 buffers)
                            + 2 * Cin * K * Cout           # resident bcast weights
                            + 2 * Nb * Cout)               # output stream
    tl_cap = min(_TL_CAP, max(_LANE, (_VMEM_BUDGET // per_lane) * _LANE))
    n_lt = _cdiv(L_out, tl_cap)
    TL = _cdiv(_cdiv(L_out, n_lt), _LANE) * _LANE
    L_out_pad = n_lt * TL
    H = max((K - 1) * dilation, 1)                         # right halo per tile

    # ---- pad x once (conv padding + tail so every tile's main+halo is in range)
    L_tot = max(L + 2 * padding, n_lt * TL * stride + H)
    x_pad = jnp.pad(x.astype(jnp.float32),
                    ((0, 0), (0, 0), (padding, L_tot - L - padding)))
    x_flat = x_pad.reshape(N * Cin, L_tot)
    # Tiny halo array: the H columns just right of each tile's main block.
    hidx = ((jnp.arange(n_lt) + 1) * (TL * stride))[:, None] + jnp.arange(H)[None, :]
    x_halo = jnp.transpose(x_flat[:, hidx], (1, 0, 2))     # (n_lt, N*Cin, H)

    # ---- weight columns pre-broadcast to lane width (hoisted out of the kernel)
    w_cols = jnp.transpose(conv_weight.astype(jnp.float32), (1, 2, 0))  # (Cin,K,Cout)
    w_cols = w_cols.reshape(Cin * K, Cout)                 # j = ci*K + k
    wb = jnp.broadcast_to(w_cols[:, :, None], (Cin * K, Cout, TL))

    # ---- BlockSpecs (shared by both passes) ----
    xm_map = lambda nb, lt: (nb, lt)
    if n_nb * n_lt >= 3:
        xm_spec = pl.BlockSpec((Nb * Cin, TL * stride), xm_map,
                               pipeline_mode=pl.Buffered(3))
    else:
        xm_spec = pl.BlockSpec((Nb * Cin, TL * stride), xm_map)
    xh_spec = pl.BlockSpec((1, Nb * Cin, H), lambda nb, lt: (lt, nb, 0))
    wb_spec = pl.BlockSpec((Cin * K, Cout, TL), lambda nb, lt: (0, 0, 0))
    cparams = pltpu.CompilerParams(
        dimension_semantics=("parallel", "parallel"),
        vmem_limit_bytes=32 * 1024 * 1024)
    common = dict(K=K, Cin=Cin, Cout=Cout, Nb=Nb, TL=TL,
                  stride=stride, dilation=dilation)

    # ---- pass 1: per-tile centered BN partials (fully parallel grid) ----
    stats = pl.pallas_call(
        functools.partial(_stats_kernel, L_out=L_out, **common),
        out_shape=jax.ShapeDtypeStruct((n_nb, n_lt, Cout, 2), jnp.float32),
        grid_spec=pltpu.PrefetchScalarGridSpec(
            num_scalar_prefetch=0,
            grid=(n_nb, n_lt),
            in_specs=[xm_spec, xh_spec, wb_spec],
            out_specs=pl.BlockSpec((1, 1, Cout, 2), lambda nb, lt: (nb, lt, 0, 0)),
        ),
        compiler_params=cparams,
    )(x_flat, x_halo, wb)

    # ---- tiny JAX glue: combine per-tile partials -> per-channel scale/shift ----
    valid = jnp.minimum(TL, L_out - jnp.arange(n_lt) * TL).astype(jnp.float32)
    cnt = (Nb * valid)[None, :, None]                      # (1, n_lt, 1)
    total = float(N * L_out)
    sums, m2s = stats[..., 0], stats[..., 1]               # (n_nb, n_lt, Cout)
    mean = jnp.sum(sums, axis=(0, 1)) / total              # (Cout,)
    m2 = (jnp.sum(m2s, axis=(0, 1))
          + jnp.sum(cnt * (sums / cnt - mean) ** 2, axis=(0, 1)))
    var = m2 / total                                       # biased, as BN uses
    scale = (gamma.astype(jnp.float32) * lax.rsqrt(var + BN_EPS)).reshape(Cout, 1)
    shift = beta.astype(jnp.float32).reshape(Cout, 1) - mean.reshape(Cout, 1) * scale

    # ---- pass 2: conv + scale/shift + ReLU, lane-dense stores ----
    out = pl.pallas_call(
        functools.partial(_norm_kernel, **common),
        out_shape=jax.ShapeDtypeStruct((N, Cout, L_out_pad), jnp.float32),
        grid_spec=pltpu.PrefetchScalarGridSpec(
            num_scalar_prefetch=0,
            grid=(n_nb, n_lt),
            in_specs=[xm_spec, xh_spec, wb_spec,
                      pl.BlockSpec((Cout, 1), lambda nb, lt: (0, 0)),
                      pl.BlockSpec((Cout, 1), lambda nb, lt: (0, 0))],
            out_specs=pl.BlockSpec((Nb, Cout, TL), lambda nb, lt: (nb, 0, lt)),
        ),
        compiler_params=cparams,
    )(x_flat, x_halo, wb, scale, shift)

    return out if L_out_pad == L_out else out[:, :, :L_out]


def _reference(x, conv_weight, gamma, beta, *, stride, padding, dilation):
    """Pure-JAX reference matching torch training-mode forward (dropout=eval)."""
    y = jax.lax.conv_general_dilated(
        x, conv_weight,
        window_strides=(stride,),
        padding=[(padding, padding)],
        rhs_dilation=(dilation,),
        dimension_numbers=("NCH", "OIH", "NCH"))
    mean = jnp.mean(y, axis=(0, 2), keepdims=True)
    var = jnp.mean((y - mean) ** 2, axis=(0, 2), keepdims=True)
    y_hat = (y - mean) * jax.lax.rsqrt(var + BN_EPS)
    y_bn = y_hat * gamma.reshape(1, -1, 1) + beta.reshape(1, -1, 1)
    return jnp.maximum(y_bn, 0.0)


if __name__ == "__main__":
    # FirstTemporalBlock(n_input, channels, kernel_size, stride, dilation, padding, dropout)
    n_input, channels, kernel_size = 4, 8, 3
    stride, dilation, padding, dropout = 1, 1, 1, 0.2   # dropout unused (eval)

    N, L = 2, 16

    key = jax.random.PRNGKey(0)
    kx, kw = jax.random.split(key)
    x = jax.random.normal(kx, (N, n_input, L), dtype=jnp.float32)
    # init_weights(): conv.weight ~ N(0, 0.01); conv has no bias.
    conv_weight = 0.01 * jax.random.normal(
        kw, (channels, n_input, kernel_size), dtype=jnp.float32)
    # BatchNorm1d default init: gamma=1, beta=0.
    gamma = jnp.ones((channels,), dtype=jnp.float32)
    beta = jnp.zeros((channels,), dtype=jnp.float32)

    out = first_temporal_block(
        x, conv_weight, gamma, beta,
        stride=stride, padding=padding, dilation=dilation)
    out = jax.block_until_ready(out)

    ref = _reference(
        x, conv_weight, gamma, beta,
        stride=stride, padding=padding, dilation=dilation)

    assert out.shape == ref.shape, (out.shape, ref.shape)
    assert jnp.allclose(out, ref, atol=1e-4, rtol=1e-4), "mismatch vs reference"

    print("KERNEL_OK")
</pallas_src>

<mosaic_0001>
module attributes {stable_mosaic.version = 11 : i64} {
  func.func @_stats_kernel(%arg0: i32, %arg1: i32, %arg2: memref<8x128xf32, #tpu.memory_space<vmem>>, %arg3: memref<1x8x2xf32, #tpu.memory_space<vmem>>, %arg4: memref<12x8x128xf32, #tpu.memory_space<vmem>>, %arg5: memref<1x1x8x2xf32, #tpu.memory_space<vmem>>) attributes {dimension_semantics = [#tpu.dimension_semantics<parallel>, #tpu.dimension_semantics<parallel>], iteration_bounds = array<i64: 1, 1>, scalar_prefetch = 0 : i64, scratch_operands = 0 : i64, tpu.core_type = #tpu.core_type<tc>, window_params = [{transform_indices = @transform_0, window_bounds = array<i64: 8, 128>}, {transform_indices = @transform_1, window_bounds = array<i64: 1, 8, 2>}, {pipeline_mode = #tpu.pipeline_mode<synchronous>, transform_indices = @transform_2, window_bounds = array<i64: 12, 8, 128>}, {transform_indices = @transform_3, window_bounds = array<i64: 1, 1, 8, 2>}]} {
    %c0 = arith.constant 0 : index
    %c0_0 = arith.constant 0 : index
    %0 = vector.load %arg2[%c0, %c0_0] : memref<8x128xf32, #tpu.memory_space<vmem>>, vector<8x128xf32>
    %c0_1 = arith.constant 0 : index
    %c0_2 = arith.constant 0 : index
    %c0_3 = arith.constant 0 : index
    %1 = vector.load %arg3[%c0_1, %c0_2, %c0_3] : memref<1x8x2xf32, #tpu.memory_space<vmem>>, vector<1x8x2xf32>
    %2 = vector.shape_cast %1 : vector<1x8x2xf32> to vector<8x2xf32>
    %3 = tpu.concatenate %0, %2 in 1 : vector<8x128xf32>, vector<8x2xf32> -> vector<8x130xf32>
    %4 = vector.shape_cast %3 : vector<8x130xf32> to vector<2x4x130xf32>
    %cst = arith.constant 0.000000e+00 : f32
    %5 = vector.broadcast %cst : f32 to vector<2x8x128xf32>
    %6 = vector.extract_strided_slice %4 {offsets = [0, 0, 0], sizes = [2, 4, 128], strides = [1, 1, 1]} : vector<2x4x130xf32> to vector<2x4x128xf32>
    %c0_4 = arith.constant 0 : index
    %c0_5 = arith.constant 0 : index
    %c0_6 = arith.constant 0 : index
    %7 = vector.load %arg4[%c0_4, %c0_5, %c0_6] : memref<12x8x128xf32, #tpu.memory_space<vmem>>, vector<1x8x128xf32>
    %8 = vector.shape_cast %7 : vector<1x8x128xf32> to vector<8x128xf32>
    %9 = vector.extract_strided_slice %6 {offsets = [0, 0, 0], sizes = [2, 1, 128], strides = [1, 1, 1]} : vector<2x4x128xf32> to vector<2x1x128xf32>
    %10 = vector.shape_cast %8 : vector<8x128xf32> to vector<1x8x128xf32>
    %11 = vector.broadcast %10 : vector<1x8x128xf32> to vector<2x8x128xf32>
    %12 = vector.broadcast %9 : vector<2x1x128xf32> to vector<2x8x128xf32>
    %13 = arith.mulf %11, %12 : vector<2x8x128xf32>
    %14 = arith.addf %5, %13 : vector<2x8x128xf32>
    %c3 = arith.constant 3 : index
    %c0_7 = arith.constant 0 : index
    %c0_8 = arith.constant 0 : index
    %15 = vector.load %arg4[%c3, %c0_7, %c0_8] : memref<12x8x128xf32, #tpu.memory_space<vmem>>, vector<1x8x128xf32>
    %16 = vector.shape_cast %15 : vector<1x8x128xf32> to vector<8x128xf32>
    %17 = vector.extract_strided_slice %6 {offsets = [0, 1, 0], sizes = [2, 1, 128], strides = [1, 1, 1]} : vector<2x4x128xf32> to vector<2x1x128xf32>
    %18 = vector.shape_cast %16 : vector<8x128xf32> to vector<1x8x128xf32>
    %19 = vector.broadcast %18 : vector<1x8x128xf32> to vector<2x8x128xf32>
    %20 = vector.broadcast %17 : vector<2x1x128xf32> to vector<2x8x128xf32>
    %21 = arith.mulf %19, %20 : vector<2x8x128xf32>
    %22 = arith.addf %14, %21 : vector<2x8x128xf32>
    %c6 = arith.constant 6 : index
    %c0_9 = arith.constant 0 : index
    %c0_10 = arith.constant 0 : index
    %23 = vector.load %arg4[%c6, %c0_9, %c0_10] : memref<12x8x128xf32, #tpu.memory_space<vmem>>, vector<1x8x128xf32>
    %24 = vector.shape_cast %23 : vector<1x8x128xf32> to vector<8x128xf32>
    %25 = vector.extract_strided_slice %6 {offsets = [0, 2, 0], sizes = [2, 1, 128], strides = [1, 1, 1]} : vector<2x4x128xf32> to vector<2x1x128xf32>
    %26 = vector.shape_cast %24 : vector<8x128xf32> to vector<1x8x128xf32>
    %27 = vector.broadcast %26 : vector<1x8x128xf32> to vector<2x8x128xf32>
    %28 = vector.broadcast %25 : vector<2x1x128xf32> to vector<2x8x128xf32>
    %29 = arith.mulf %27, %28 : vector<2x8x128xf32>
    %30 = arith.addf %22, %29 : vector<2x8x128xf32>
    %c9 = arith.constant 9 : index
    %c0_11 = arith.constant 0 : index
    %c0_12 = arith.constant 0 : index
    %31 = vector.load %arg4[%c9, %c0_11, %c0_12] : memref<12x8x128xf32, #tpu.memory_space<vmem>>, vector<1x8x128xf32>
    %32 = vector.shape_cast %31 : vector<1x8x128xf32> to vector<8x128xf32>
    %33 = vector.extract_strided_slice %6 {offsets = [0, 3, 0], sizes = [2, 1, 128], strides = [1, 1, 1]} : vector<2x4x128xf32> to vector<2x1x128xf32>
    %34 = vector.shape_cast %32 : vector<8x128xf32> to vector<1x8x128xf32>
    %35 = vector.broadcast %34 : vector<1x8x128xf32> to vector<2x8x128xf32>
    %36 = vector.broadcast %33 : vector<2x1x128xf32> to vector<2x8x128xf32>
    %37 = arith.mulf %35, %36 : vector<2x8x128xf32>
    %38 = arith.addf %30, %37 : vector<2x8x128xf32>
    %39 = vector.extract_strided_slice %4 {offsets = [0, 0, 1], sizes = [2, 4, 128], strides = [1, 1, 1]} : vector<2x4x130xf32> to vector<2x4x128xf32>
    %c1 = arith.constant 1 : index
    %c0_13 = arith.constant 0 : index
    %c0_14 = arith.constant 0 : index
    %40 = vector.load %arg4[%c1, %c0_13, %c0_14] : memref<12x8x128xf32, #tpu.memory_space<vmem>>, vector<1x8x128xf32>
    %41 = vector.shape_cast %40 : vector<1x8x128xf32> to vector<8x128xf32>
    %42 = vector.extract_strided_slice %39 {offsets = [0, 0, 0], sizes = [2, 1, 128], strides = [1, 1, 1]} : vector<2x4x128xf32> to vector<2x1x128xf32>
    %43 = vector.shape_cast %41 : vector<8x128xf32> to vector<1x8x128xf32>
    %44 = vector.broadcast %43 : vector<1x8x128xf32> to vector<2x8x128xf32>
    %45 = vector.broadcast %42 : vector<2x1x128xf32> to vector<2x8x128xf32>
    %46 = arith.mulf %44, %45 : vector<2x8x128xf32>
    %47 = arith.addf %38, %46 : vector<2x8x128xf32>
    %c4 = arith.constant 4 : index
    %c0_15 = arith.constant 0 : index
    %c0_16 = arith.constant 0 : index
    %48 = vector.load %arg4[%c4, %c0_15, %c0_16] : memref<12x8x128xf32, #tpu.memory_space<vmem>>, vector<1x8x128xf32>
    %49 = vector.shape_cast %48 : vector<1x8x128xf32> to vector<8x128xf32>
    %50 = vector.extract_strided_slice %39 {offsets = [0, 1, 0], sizes = [2, 1, 128], strides = [1, 1, 1]} : vector<2x4x128xf32> to vector<2x1x128xf32>
    %51 = vector.shape_cast %49 : vector<8x128xf32> to vector<1x8x128xf32>
    %52 = vector.broadcast %51 : vector<1x8x128xf32> to vector<2x8x128xf32>
    %53 = vector.broadcast %50 : vector<2x1x128xf32> to vector<2x8x128xf32>
    %54 = arith.mulf %52, %53 : vector<2x8x128xf32>
    %55 = arith.addf %47, %54 : vector<2x8x128xf32>
    %c7 = arith.constant 7 : index
    %c0_17 = arith.constant 0 : index
    %c0_18 = arith.constant 0 : index
    %56 = vector.load %arg4[%c7, %c0_17, %c0_18] : memref<12x8x128xf32, #tpu.memory_space<vmem>>, vector<1x8x128xf32>
    %57 = vector.shape_cast %56 : vector<1x8x128xf32> to vector<8x128xf32>
    %58 = vector.extract_strided_slice %39 {offsets = [0, 2, 0], sizes = [2, 1, 128], strides = [1, 1, 1]} : vector<2x4x128xf32> to vector<2x1x128xf32>
    %59 = vector.shape_cast %57 : vector<8x128xf32> to vector<1x8x128xf32>
    %60 = vector.broadcast %59 : vector<1x8x128xf32> to vector<2x8x128xf32>
    %61 = vector.broadcast %58 : vector<2x1x128xf32> to vector<2x8x128xf32>
    %62 = arith.mulf %60, %61 : vector<2x8x128xf32>
    %63 = arith.addf %55, %62 : vector<2x8x128xf32>
    %c10 = arith.constant 10 : index
    %c0_19 = arith.constant 0 : index
    %c0_20 = arith.constant 0 : index
    %64 = vector.load %arg4[%c10, %c0_19, %c0_20] : memref<12x8x128xf32, #tpu.memory_space<vmem>>, vector<1x8x128xf32>
    %65 = vector.shape_cast %64 : vector<1x8x128xf32> to vector<8x128xf32>
    %66 = vector.extract_strided_slice %39 {offsets = [0, 3, 0], sizes = [2, 1, 128], strides = [1, 1, 1]} : vector<2x4x128xf32> to vector<2x1x128xf32>
    %67 = vector.shape_cast %65 : vector<8x128xf32> to vector<1x8x128xf32>
    %68 = vector.broadcast %67 : vector<1x8x128xf32> to vector<2x8x128xf32>
    %69 = vector.broadcast %66 : vector<2x1x128xf32> to vector<2x8x128xf32>
    %70 = arith.mulf %68, %69 : vector<2x8x128xf32>
    %71 = arith.addf %63, %70 : vector<2x8x128xf32>
    %72 = vector.extract_strided_slice %4 {offsets = [0, 0, 2], sizes = [2, 4, 128], strides = [1, 1, 1]} : vector<2x4x130xf32> to vector<2x4x128xf32>
    %c2 = arith.constant 2 : index
    %c0_21 = arith.constant 0 : index
    %c0_22 = arith.constant 0 : index
    %73 = vector.load %arg4[%c2, %c0_21, %c0_22] : memref<12x8x128xf32, #tpu.memory_space<vmem>>, vector<1x8x128xf32>
    %74 = vector.shape_cast %73 : vector<1x8x128xf32> to vector<8x128xf32>
    %75 = vector.extract_strided_slice %72 {offsets = [0, 0, 0], sizes = [2, 1, 128], strides = [1, 1, 1]} : vector<2x4x128xf32> to vector<2x1x128xf32>
    %76 = vector.shape_cast %74 : vector<8x128xf32> to vector<1x8x128xf32>
    %77 = vector.broadcast %76 : vector<1x8x128xf32> to vector<2x8x128xf32>
    %78 = vector.broadcast %75 : vector<2x1x128xf32> to vector<2x8x128xf32>
    %79 = arith.mulf %77, %78 : vector<2x8x128xf32>
    %80 = arith.addf %71, %79 : vector<2x8x128xf32>
    %c5 = arith.constant 5 : index
    %c0_23 = arith.constant 0 : index
    %c0_24 = arith.constant 0 : index
    %81 = vector.load %arg4[%c5, %c0_23, %c0_24] : memref<12x8x128xf32, #tpu.memory_space<vmem>>, vector<1x8x128xf32>
    %82 = vector.shape_cast %81 : vector<1x8x128xf32> to vector<8x128xf32>
    %83 = vector.extract_strided_slice %72 {offsets = [0, 1, 0], sizes = [2, 1, 128], strides = [1, 1, 1]} : vector<2x4x128xf32> to vector<2x1x128xf32>
    %84 = vector.shape_cast %82 : vector<8x128xf32> to vector<1x8x128xf32>
    %85 = vector.broadcast %84 : vector<1x8x128xf32> to vector<2x8x128xf32>
    %86 = vector.broadcast %83 : vector<2x1x128xf32> to vector<2x8x128xf32>
    %87 = arith.mulf %85, %86 : vector<2x8x128xf32>
    %88 = arith.addf %80, %87 : vector<2x8x128xf32>
    %c8 = arith.constant 8 : index
    %c0_25 = arith.constant 0 : index
    %c0_26 = arith.constant 0 : index
    %89 = vector.load %arg4[%c8, %c0_25, %c0_26] : memref<12x8x128xf32, #tpu.memory_space<vmem>>, vector<1x8x128xf32>
    %90 = vector.shape_cast %89 : vector<1x8x128xf32> to vector<8x128xf32>
    %91 = vector.extract_strided_slice %72 {offsets = [0, 2, 0], sizes = [2, 1, 128], strides = [1, 1, 1]} : vector<2x4x128xf32> to vector<2x1x128xf32>
    %92 = vector.shape_cast %90 : vector<8x128xf32> to vector<1x8x128xf32>
    %93 = vector.broadcast %92 : vector<1x8x128xf32> to vector<2x8x128xf32>
    %94 = vector.broadcast %91 : vector<2x1x128xf32> to vector<2x8x128xf32>
    %95 = arith.mulf %93, %94 : vector<2x8x128xf32>
    %96 = arith.addf %88, %95 : vector<2x8x128xf32>
    %c11 = arith.constant 11 : index
    %c0_27 = arith.constant 0 : index
    %c0_28 = arith.constant 0 : index
    %97 = vector.load %arg4[%c11, %c0_27, %c0_28] : memref<12x8x128xf32, #tpu.memory_space<vmem>>, vector<1x8x128xf32>
    %98 = vector.shape_cast %97 : vector<1x8x128xf32> to vector<8x128xf32>
    %99 = vector.extract_strided_slice %72 {offsets = [0, 3, 0], sizes = [2, 1, 128], strides = [1, 1, 1]} : vector<2x4x128xf32> to vector<2x1x128xf32>
    %100 = vector.shape_cast %98 : vector<8x128xf32> to vector<1x8x128xf32>
    %101 = vector.broadcast %100 : vector<1x8x128xf32> to vector<2x8x128xf32>
    %102 = vector.broadcast %99 : vector<2x1x128xf32> to vector<2x8x128xf32>
    %103 = arith.mulf %101, %102 : vector<2x8x128xf32>
    %104 = arith.addf %96, %103 : vector<2x8x128xf32>
    %c128_i32 = arith.constant 128 : i32
    %105 = arith.muli %arg1, %c128_i32 : i32
    %c16_i32 = arith.constant 16 : i32
    %106 = arith.subi %c16_i32, %105 : i32
    %c128_i32_29 = arith.constant 128 : i32
    %107 = arith.minsi %c128_i32_29, %106 : i32
    %108 = tpu.iota {dimensions = array<i32: 2>} : vector<1x1x128xi32>
    %109 = vector.broadcast %107 : i32 to vector<1x1x128xi32>
    %110 = arith.cmpi slt, %108, %109 : vector<1x1x128xi32>
    %c2_i32 = arith.constant 2 : i32
    %111 = arith.muli %c2_i32, %107 : i32
    %112 = arith.sitofp %111 : i32 to f32
    %cst_30 = arith.constant 0.000000e+00 : f32
    %113 = vector.shape_cast %110 : vector<1x1x128xi1> to vector<1x1x128xi1>
    %114 = vector.broadcast %113 : vector<1x1x128xi1> to vector<2x8x128xi1>
    %115 = vector.broadcast %cst_30 : f32 to vector<2x8x128xf32>
    %116 = arith.select %114, %104, %115 : vector<2x8x128xi1>, vector<2x8x128xf32>
    %cst_31 = arith.constant dense<0.000000e+00> : vector<2x8xf32>
    %117 = vector.multi_reduction <add>, %116, %cst_31 [2] : vector<2x8x128xf32> to vector<2x8xf32>
    %118 = vector.shape_cast %117 : vector<2x8xf32> to vector<2x8x1xf32>
    %cst_32 = arith.constant dense<0.000000e+00> : vector<8x1xf32>
    %119 = vector.multi_reduction <add>, %118, %cst_32 [0] : vector<2x8x1xf32> to vector<8x1xf32>
    %120 = vector.shape_cast %119 : vector<8x1xf32> to vector<1x8x1xf32>
    %121 = vector.broadcast %112 : f32 to vector<1x8x1xf32>
    %122 = arith.divf %120, %121 : vector<1x8x1xf32>
    %123 = vector.broadcast %122 : vector<1x8x1xf32> to vector<2x8x128xf32>
    %124 = arith.subf %104, %123 : vector<2x8x128xf32>
    %cst_33 = arith.constant 0.000000e+00 : f32
    %125 = vector.shape_cast %110 : vector<1x1x128xi1> to vector<1x1x128xi1>
    %126 = vector.broadcast %125 : vector<1x1x128xi1> to vector<2x8x128xi1>
    %127 = vector.broadcast %cst_33 : f32 to vector<2x8x128xf32>
    %128 = arith.select %126, %124, %127 : vector<2x8x128xi1>, vector<2x8x128xf32>
    %129 = arith.mulf %128, %128 : vector<2x8x128xf32>
    %cst_34 = arith.constant dense<0.000000e+00> : vector<2x8xf32>
    %130 = vector.multi_reduction <add>, %129, %cst_34 [2] : vector<2x8x128xf32> to vector<2x8xf32>
    %131 = vector.shape_cast %130 : vector<2x8xf32> to vector<2x8x1xf32>
    %cst_35 = arith.constant dense<0.000000e+00> : vector<8x1xf32>
    %132 = vector.multi_reduction <add>, %131, %cst_35 [0] : vector<2x8x1xf32> to vector<8x1xf32>
    %133 = vector.shape_cast %132 : vector<8x1xf32> to vector<1x8x1xf32>
    %134 = vector.shape_cast %120 : vector<1x8x1xf32> to vector<8x1xf32>
    %135 = vector.shape_cast %133 : vector<1x8x1xf32> to vector<8x1xf32>
    %136 = tpu.concatenate %134, %135 in 1 : vector<8x1xf32>, vector<8x1xf32> -> vector<8x2xf32>
    %c0_36 = arith.constant 0 : index
    %c0_37 = arith.constant 0 : index
    %c0_38 = arith.constant 0 : index
    %c0_39 = arith.constant 0 : index
    %137 = vector.load %arg5[%c0_36, %c0_37, %c0_38, %c0_39] : memref<1x1x8x2xf32, #tpu.memory_space<vmem>>, vector<1x1x8x2xf32>
    %138 = vector.shape_cast %137 : vector<1x1x8x2xf32> to vector<8x2xf32>
    %139 = vector.shape_cast %136 : vector<8x2xf32> to vector<1x1x8x2xf32>
    tpu.vector_store %arg5[%c0_36, %c0_37, %c0_38, %c0_39], %139 {strides = array<i32>} : memref<1x1x8x2xf32, #tpu.memory_space<vmem>>, vector<1x1x8x2xf32>,
    return
  }
  func.func @transform_0(%arg0: i32, %arg1: i32) -> (i32, i32) {
    %c0_i32 = arith.constant 0 : i32
    return %arg0, %arg1 : i32, i32
  }
  func.func @transform_1(%arg0: i32, %arg1: i32) -> (i32, i32, i32) {
    %c0_i32 = arith.constant 0 : i32
    %c0_i32_0 = arith.constant 0 : i32
    return %arg1, %arg0, %c0_i32 : i32, i32, i32
  }
  func.func @transform_2(%arg0: i32, %arg1: i32) -> (i32, i32, i32) {
    %c0_i32 = arith.constant 0 : i32
    %c0_i32_0 = arith.constant 0 : i32
    %c0_i32_1 = arith.constant 0 : i32
    %c0_i32_2 = arith.constant 0 : i32
    return %c0_i32, %c0_i32_0, %c0_i32_1 : i32, i32, i32
  }
  func.func @transform_3(%arg0: i32, %arg1: i32) -> (i32, i32, i32, i32) {
    %c0_i32 = arith.constant 0 : i32
    %c0_i32_0 = arith.constant 0 : i32
    %c0_i32_1 = arith.constant 0 : i32
    return %arg0, %arg1, %c0_i32, %c0_i32_0 : i32, i32, i32, i32
  }
}

</mosaic_0001>

<llo_original>
// kernel: tpu_custom_call.1
$region0: #{tpu_custom_call.1}
  #allocation0 [shape = 'u32[]', space=smem, size = 0x4, offset = 0x4, fixed_abs, tag = 'smem constant byte address 0x4 - core index']
  #allocation1 [shape = 'u32[72,128]{1,0:T(1,128)}', space=vmem, size = 0x9000, scoped, tag = 'internal scratch']
  %s0 = inlined_call_operand.hbm [shape: f32[8,130], index: 0, kind: input, shape index: {}]
  %s1 = inlined_call_operand.vmem [shape: f32[1,8,2], index: 1, kind: input, shape index: {}]
  %s2 = inlined_call_operand.hbm [shape: f32[12,8,128], index: 2, kind: input, shape index: {}]
  %s3 = inlined_call_operand.vmem [shape: f32[1,1,8,2], index: 3, kind: output, shape index: {}]
  %s4 = sld [smem:[#allocation0]]
  $region30: #{tpu_custom_call.1} parent=0
    _
  %s6 = ssub.s32 1, %s4
  %s7 = scalar_select 0, %s6, %s4
  $region1: #{tpu_custom_call.1} parent=0
    #allocation2 [shape = 'u8[4096]{0}', space=vmem, size = 0x1000, scoped, tag = 'input window, operand 0, single buffered']
    #allocation3 [shape = 's32[1]{0}', space=sflag, size = 0x4, scoped, tag = 'scoped memory for tpu_custom_call.1']
    #allocation4 [shape = 'u8[49152]{0}', space=vmem, size = 0xc000, scoped, tag = 'input window, operand 2, single buffered']
    #allocation5 [shape = 's32[1]{0}', space=sflag, size = 0x4, scoped, tag = 'scoped memory for tpu_custom_call.1']
    %8 = vsyncpa [#allocation3], 0
    %9 = vsyncpa [#allocation5], 0
    // Predicated region
    $region2: #{tpu_custom_call.1} parent=1 // pred_check
      _
    $region3: #{tpu_custom_call.1} parent=1 // pred_check_branch
      %11 = sbr.rel (0) target = $region5
    $region4: #{tpu_custom_call.1} parent=1 // pred_region
      %13 = vsyncadd [#allocation3], 0
      %s15 = sshll.u32 %s0, 4
      %s16 = int_to_ptr.hbm [resolvable:$true] %s15
      %s17 = sshll.u32 [#allocation2], 4
      %s18 = int_to_ptr.vmem [resolvable:$true] %s17
      %20 = dma.hbm_to_vmem [thread:$0]  %s16, 128, %s18, [#allocation3]
    $region5: #{tpu_custom_call.1} parent=1 // pred_fallthru
      _
    // Predicated region
    $region6: #{tpu_custom_call.1} parent=1 // pred_check
      _
    $region7: #{tpu_custom_call.1} parent=1 // pred_check_branch
      %22 = sbr.rel (0) target = $region9
    $region8: #{tpu_custom_call.1} parent=1 // pred_region
      _
    $region9: #{tpu_custom_call.1} parent=1 // pred_fallthru
      _
    // Predicated region
    $region10: #{tpu_custom_call.1} parent=1 // pred_check
      _
    $region11: #{tpu_custom_call.1} parent=1 // pred_check_branch
      %24 = sbr.rel (0) target = $region13
    $region12: #{tpu_custom_call.1} parent=1 // pred_region
      %26 = vsyncadd [#allocation5], 0
      %s27 = sshll.u32 %s2, 4
      %s28 = int_to_ptr.hbm [resolvable:$true] %s27
      %s29 = sshll.u32 [#allocation4], 4
      %s30 = int_to_ptr.vmem [resolvable:$true] %s29
      %35 = dma.hbm_to_vmem [thread:$0]  %s28, 1536, %s30, [#allocation5], 128, 128, 8
    $region13: #{tpu_custom_call.1} parent=1 // pred_fallthru
      _
    // Predicated region
    $region14: #{tpu_custom_call.1} parent=1 // pred_check
      _
    $region15: #{tpu_custom_call.1} parent=1 // pred_check_branch
      %37 = sbr.rel (0) target = $region17
    $region16: #{tpu_custom_call.1} parent=1 // pred_region
      %39 = dma.done [#allocation3], 128
    $region17: #{tpu_custom_call.1} parent=1 // pred_fallthru
      _
    // Predicated region
    $region18: #{tpu_custom_call.1} parent=1 // pred_check
      _
    $region19: #{tpu_custom_call.1} parent=1 // pred_check_branch
      %41 = sbr.rel (0) target = $region21
    $region20: #{tpu_custom_call.1} parent=1 // pred_region
      %43 = dma.done [#allocation5], 1536
    $region21: #{tpu_custom_call.1} parent=1 // pred_fallthru
      _
    %v44 = vld [vmem:[#allocation2] sm:$0xff]
    %v45 = vld [vmem:[%s1] sm:$0xff]
    %v48 = vrot.slane %v45, 4
    %vm49 = vcmask 1043456
    %v50 = vsel %vm49, %v44, %v48
    %v51 = vsel %vm49, %v48, %v44
    %v52 = vrot.slane %v51, 4
    %v55 = vld [vmem:[#allocation4] sm:$0xff]
    %v56 = vperm.slane %v50, 0
    %v57 = vperm.slane %v52, 0
    %v58 = vmul.f32 %v55, %v56
    %v59 = vmul.f32 %v55, %v57
    %v60 = vadd.f32 %v58, 0.0
    %v61 = vadd.f32 %v59, 0.0
    %s62 = scalar_lea.vmem [#allocation4], 24
    %v63 = vld [vmem:[%s62] sm:$0xff]
    %v64 = vperm.slane %v50, 1
    %v65 = vperm.slane %v52, 1
    %v66 = vmul.f32 %v63, %v64
    %v67 = vmul.f32 %v63, %v65
    %v68 = vadd.f32 %v60, %v66
    %v69 = vadd.f32 %v61, %v67
    %s70 = scalar_lea.vmem [#allocation4], 48
    %v71 = vld [vmem:[%s70] sm:$0xff]
    %v72 = vperm.slane %v50, 2
    %v73 = vperm.slane %v52, 2
    %v74 = vmul.f32 %v71, %v72
    %v75 = vmul.f32 %v71, %v73
    %v76 = vadd.f32 %v68, %v74
    %v77 = vadd.f32 %v69, %v75
    %s78 = scalar_lea.vmem [#allocation4], 72
    %v79 = vld [vmem:[%s78] sm:$0xff]
    %v80 = vperm.slane %v50, 3
    %v81 = vperm.slane %v52, 3
    %v82 = vmul.f32 %v79, %v80
    %v83 = vmul.f32 %v79, %v81
    %v84 = vadd.f32 %v76, %v82
    %v85 = vadd.f32 %v77, %v83
    %s86 = scalar_lea.vmem [#allocation4], 8
    %v87 = vld [vmem:[%s86] sm:$0xff]
    %v88 = vperm.slane %v50, 0
    %v89 = vperm.slane %v50, 4
    %v90 = vperm.slane %v52, 0
    %v91 = vperm.slane %v52, 4
    %v96 = vperm.slane %v88, 0
    %v97 = vperm.slane %v89, 0
    %v98 = vperm.slane %v90, 0
    %v99 = vperm.slane %v91, 0
    %104 = vrot.lane.b32.xlu0 %v96, 127
    %v105 = vpop.permute.xlu0 %104
    %106 = vrot.lane.b32.xlu0 %v97, 127
    %v107 = vpop.permute.xlu0 %106
    %108 = vrot.lane.b32.xlu0 %v98, 127
    %v109 = vpop.permute.xlu0 %108
    %110 = vrot.lane.b32.xlu0 %v99, 127
    %v111 = vpop.permute.xlu0 %110
    %vm112 = vcmask 1039360
    %v113 = vsel %vm112, %v105, %v107
    %v114 = vsel %vm112, %v109, %v111
    %v117 = vmul.f32 %v87, %v113
    %v118 = vmul.f32 %v87, %v114
    %v119 = vadd.f32 %v84, %v117
    %v120 = vadd.f32 %v85, %v118
    %s121 = scalar_lea.vmem [#allocation4], 32
    %v122 = vld [vmem:[%s121] sm:$0xff]
    %v123 = vperm.slane %v50, 1
    %v124 = vperm.slane %v50, 5
    %v125 = vperm.slane %v52, 1
    %v126 = vperm.slane %v52, 5
    %v131 = vperm.slane %v123, 1
    %v132 = vperm.slane %v124, 1
    %v133 = vperm.slane %v125, 1
    %v134 = vperm.slane %v126, 1
    %139 = vrot.lane.b32.xlu0 %v131, 127
    %v140 = vpop.permute.xlu0 %139
    %141 = vrot.lane.b32.xlu0 %v132, 127
    %v142 = vpop.permute.xlu0 %141
    %143 = vrot.lane.b32.xlu0 %v133, 127
    %v144 = vpop.permute.xlu0 %143
    %145 = vrot.lane.b32.xlu0 %v134, 127
    %v146 = vpop.permute.xlu0 %145
    %v147 = vsel %vm112, %v140, %v142
    %v148 = vsel %vm112, %v144, %v146
    %v151 = vmul.f32 %v122, %v147
    %v152 = vmul.f32 %v122, %v148
    %v153 = vadd.f32 %v119, %v151
    %v154 = vadd.f32 %v120, %v152
    %s155 = scalar_lea.vmem [#allocation4], 56
    %v156 = vld [vmem:[%s155] sm:$0xff]
    %v157 = vperm.slane %v50, 2
    %v158 = vperm.slane %v50, 6
    %v159 = vperm.slane %v52, 2
    %v160 = vperm.slane %v52, 6
    %v165 = vperm.slane %v157, 2
    %v166 = vperm.slane %v158, 2
    %v167 = vperm.slane %v159, 2
    %v168 = vperm.slane %v160, 2
    %173 = vrot.lane.b32.xlu0 %v165, 127
    %v174 = vpop.permute.xlu0 %173
    %175 = vrot.lane.b32.xlu0 %v166, 127
    %v176 = vpop.permute.xlu0 %175
    %177 = vrot.lane.b32.xlu0 %v167, 127
    %v178 = vpop.permute.xlu0 %177
    %179 = vrot.lane.b32.xlu0 %v168, 127
    %v180 = vpop.permute.xlu0 %179
    %v181 = vsel %vm112, %v174, %v176
    %v182 = vsel %vm112, %v178, %v180
    %v185 = vmul.f32 %v156, %v181
    %v186 = vmul.f32 %v156, %v182
    %v187 = vadd.f32 %v153, %v185
    %v188 = vadd.f32 %v154, %v186
    %s189 = scalar_lea.vmem [#allocation4], 80
    %v190 = vld [vmem:[%s189] sm:$0xff]
    %v191 = vperm.slane %v50, 3
    %v192 = vperm.slane %v50, 7
    %v193 = vperm.slane %v52, 3
    %v194 = vperm.slane %v52, 7
    %v199 = vperm.slane %v191, 3
    %v200 = vperm.slane %v192, 3
    %v201 = vperm.slane %v193, 3
    %v202 = vperm.slane %v194, 3
    %207 = vrot.lane.b32.xlu0 %v199, 127
    %v208 = vpop.permute.xlu0 %207
    %209 = vrot.lane.b32.xlu0 %v200, 127
    %v210 = vpop.permute.xlu0 %209
    %211 = vrot.lane.b32.xlu0 %v201, 127
    %v212 = vpop.permute.xlu0 %211
    %213 = vrot.lane.b32.xlu0 %v202, 127
    %v214 = vpop.permute.xlu0 %213
    %v215 = vsel %vm112, %v208, %v210
    %v216 = vsel %vm112, %v212, %v214
    %v219 = vmul.f32 %v190, %v215
    %v220 = vmul.f32 %v190, %v216
    %v221 = vadd.f32 %v187, %v219
    %v222 = vadd.f32 %v188, %v220
    %s223 = scalar_lea.vmem [#allocation4], 16
    %v224 = vld [vmem:[%s223] sm:$0xff]
    %225 = vrot.lane.b32.xlu0 %v96, 126
    %v226 = vpop.permute.xlu0 %225
    %227 = vrot.lane.b32.xlu0 %v97, 126
    %v228 = vpop.permute.xlu0 %227
    %229 = vrot.lane.b32.xlu0 %v98, 126
    %v230 = vpop.permute.xlu0 %229
    %231 = vrot.lane.b32.xlu0 %v99, 126
    %v232 = vpop.permute.xlu0 %231
    %vm233 = vcmask 1031168
    %v234 = vsel %vm233, %v226, %v228
    %v235 = vsel %vm233, %v230, %v232
    %v238 = vmul.f32 %v224, %v234
    %v239 = vmul.f32 %v224, %v235
    %v240 = vadd.f32 %v221, %v238
    %v241 = vadd.f32 %v222, %v239
    %s242 = scalar_lea.vmem [#allocation4], 40
    %v243 = vld [vmem:[%s242] sm:$0xff]
    %244 = vrot.lane.b32.xlu0 %v131, 126
    %v245 = vpop.permute.xlu0 %244
    %246 = vrot.lane.b32.xlu0 %v132, 126
    %v247 = vpop.permute.xlu0 %246
    %248 = vrot.lane.b32.xlu0 %v133, 126
    %v249 = vpop.permute.xlu0 %248
    %250 = vrot.lane.b32.xlu0 %v134, 126
    %v251 = vpop.permute.xlu0 %250
    %v252 = vsel %vm233, %v245, %v247
    %v253 = vsel %vm233, %v249, %v251
    %v256 = vmul.f32 %v243, %v252
    %v257 = vmul.f32 %v243, %v253
    %v258 = vadd.f32 %v240, %v256
    %v259 = vadd.f32 %v241, %v257
    %s260 = scalar_lea.vmem [#allocation4], 64
    %v261 = vld [vmem:[%s260] sm:$0xff]
    %262 = vrot.lane.b32.xlu0 %v165, 126
    %v263 = vpop.permute.xlu0 %262
    %264 = vrot.lane.b32.xlu0 %v166, 126
    %v265 = vpop.permute.xlu0 %264
    %266 = vrot.lane.b32.xlu0 %v167, 126
    %v267 = vpop.permute.xlu0 %266
    %268 = vrot.lane.b32.xlu0 %v168, 126
    %v269 = vpop.permute.xlu0 %268
    %v270 = vsel %vm233, %v263, %v265
    %v271 = vsel %vm233, %v267, %v269
    %v274 = vmul.f32 %v261, %v270
    %v275 = vmul.f32 %v261, %v271
    %v276 = vadd.f32 %v258, %v274
    %v277 = vadd.f32 %v259, %v275
    %s278 = scalar_lea.vmem [#allocation4], 88
    %v279 = vld [vmem:[%s278] sm:$0xff]
    %280 = vrot.lane.b32.xlu0 %v199, 126
    %v281 = vpop.permute.xlu0 %280
    %282 = vrot.lane.b32.xlu0 %v200, 126
    %v283 = vpop.permute.xlu0 %282
    %284 = vrot.lane.b32.xlu0 %v201, 126
    %v285 = vpop.permute.xlu0 %284
    %286 = vrot.lane.b32.xlu0 %v202, 126
    %v287 = vpop.permute.xlu0 %286
    %v288 = vsel %vm233, %v281, %v283
    %v289 = vsel %vm233, %v285, %v287
    %v292 = vmul.f32 %v279, %v288
    %v293 = vmul.f32 %v279, %v289
    %v294 = vadd.f32 %v276, %v292
    %v295 = vadd.f32 %v277, %v293
    %s296 = smul.u32 0, 128
    %s297 = ssub.s32 16, %s296
    %p298 = scmp.lt.s32.totalorder %s297, 128
    %s299 = scalar_select %p298, %s297, 128
    %v300 = vlaneseq
    %v301 = vand.u32 %v300, 127
    %v302 = vstv %s299
    %vm303 = vcmp.lt.s32.totalorder %v301, %v302
    %s304 = smul.u32 %s299, 2
    %s305 = scvt.s32.f32 %s304
    %v306 = vsel %vm303, 1, 0
    %vm307 = vcmp.eq.s32.totalorder %v306, 1
    %v308 = vsel %vm307, %v294, 0.0
    %v309 = vsel %vm307, %v295, 0.0
    %310 = vadd.xlane.f32.xlu0 %v308
    %v311 = vpop.xlane.xlu0 %310
    %312 = vadd.xlane.f32.xlu0 %v309
    %v313 = vpop.xlane.xlu0 %312
    %v314 = vadd.f32 %v311, %v313
    %v315 = vstv %s305
    %v316 = vrcp.pop %v315
    %v317 = vmul.f32 %v315, %v316
    %v318 = vsub.f32 1.0, %v317
    %v319 = vmul.f32 %v316, %v318
    %v320 = vadd.f32 %v316, %v319
    %vm321 = vweird.f32 %v315
    %vm322 = vweird.f32 %v316
    %vm323 = vmor %vm321, %vm322
    %v324 = vsel %vm323, %v316, %v320
    %v325 = vand.u32 2147483647, %v315
    %vm326 = vcmp.eq.f32.partialorder %v325, 8.507059e+37
    %v327 = vand.u32 %v315, 2147483648
    %v328 = vor.u32 1.1754944e-38, %v327
    %v329 = vsel %vm326, %v328, %v324
    %v330 = vmul.f32 %v314, %v329
    %v331 = vsub.f32 %v294, %v330
    %v332 = vsub.f32 %v295, %v330
    %v333 = vsel %vm307, %v331, 0.0
    %v334 = vsel %vm307, %v332, 0.0
    %v335 = vmul.f32 %v333, %v333
    %v336 = vmul.f32 %v334, %v334
    %337 = vadd.xlane.f32.xlu0 %v335
    %v338 = vpop.xlane.xlu0 %337
    %339 = vadd.xlane.f32.xlu0 %v336
    %v340 = vpop.xlane.xlu0 %339
    %v341 = vadd.f32 %v338, %v340
    %vm342 = vcmask 7168
    %v343 = vsel %vm342, %v314, %v341
    %vm344 = vcmask 15360
    %345 = vst.msk [vmem:[%s3] sm:$0xff] %vm344, %v343
    // Predicated region
    $region22: #{tpu_custom_call.1} parent=1 // pred_check
      _
    $region23: #{tpu_custom_call.1} parent=1 // pred_check_branch
      %347 = sbr.rel (0) target = $region25
    $region24: #{tpu_custom_call.1} parent=1 // pred_region
      _
    $region25: #{tpu_custom_call.1} parent=1 // pred_fallthru
      _
    // Predicated region
    $region26: #{tpu_custom_call.1} parent=1 // pred_check
      _
    $region27: #{tpu_custom_call.1} parent=1 // pred_check_branch
      %349 = sbr.rel (0) target = $region29
    $region28: #{tpu_custom_call.1} parent=1 // pred_region
      _
    $region29: #{tpu_custom_call.1} parent=1 // pred_fallthru
      _
    %350 = vsyncpa [#allocation3], 1
    %351 = vsyncpa [#allocation5], 1

</llo_original>
